<compile_context>
chip_gen: v7x
topology: tpu7x:2x2x1
jax: 0.10.0
libtpu: 0.0.40
codegen_flags: <defaults>
</compile_context>

<pallas_src>
import jax
import jax.numpy as jnp
from jax.experimental import pallas as pl
from jax.experimental.pallas import tpu as pltpu


def _quant_stub(x):
    # QuantStub in float/eager (non-converted) mode is identity.
    return x


def _dequant_stub(x):
    # DeQuantStub in float/eager (non-converted) mode is identity.
    return x


def conv_gemm_kernel(lhs_ref, rhs_ref, b_ref, o_ref):
    """One MXU matmul + f32 bias epilogue (whole conv, all batch elements).

    lhs_ref: (M, Kp)  bf16  band rows of the zero-padded input (M = B*H)
    rhs_ref: (Kp, N)  bf16  Toeplitz conv weights, N = W*Cout (lane-dense)
    b_ref:   (1, N)   f32   bias tiled across W
    o_ref:   (M, N)   f32   lane-dense output slab
    """
    acc = jnp.dot(lhs_ref[...], rhs_ref[...],
                  preferred_element_type=jnp.float32)
    o_ref[...] = (acc + b_ref[...]).astype(o_ref.dtype)


def conv3x3_same_nchw(x_nchw, w, b):
    """3x3 stride-1 SAME conv.  x_nchw: (B,Cin,H,W) f32; w: (KH,KW,Cin,Cout); b: (Cout,)."""
    B, Cin, H, W = x_nchw.shape
    KH, KW, _, Cout = w.shape
    Wp = W + KW - 1
    K = KH * Wp * Cin                         # 3 * 18 * 4 = 216
    Kp = ((K + 127) // 128) * 128             # 256: lane-dense LHS, aligned bf16 RHS
    N = W * Cout                              # 16 * 8 = 128
    M = B * H                                 # 2 * 16 = 32

    # ---- layout glue (tiny; fused by XLA under jit) -----------------------
    x_nhwc = jnp.transpose(x_nchw, (0, 2, 3, 1))                  # NCHW -> NHWC
    xp = jnp.pad(x_nhwc, ((0, 0), (1, 1), (1, 1), (0, 0)))        # zero halo
    # band rows: lhs[b*H+h, (kh*Wp+wp)*Cin+ci] = xp[b, h+kh, wp, ci]
    rows = jnp.stack([xp[:, kh:kh + H] for kh in range(KH)], axis=2)
    lhs = rows.reshape(M, K)
    lhs = jnp.pad(lhs, ((0, 0), (0, Kp - K))).astype(jnp.bfloat16)   # (32, 256)

    # Toeplitz weights: rhs[(kh*Wp+wp)*Cin+ci, wo*Cout+co] =
    #                       w[kh, wp-wo, ci, co] if 0 <= wp-wo < KW else 0
    wp_idx = jnp.arange(Wp)[:, None]                              # (Wp, 1)
    wo_idx = jnp.arange(W)[None, :]                               # (1, W)
    rhs5 = jnp.zeros((KH, Wp, Cin, W, Cout), jnp.float32)
    for kw in range(KW):
        band = (wp_idx == wo_idx + kw).astype(jnp.float32)        # (Wp, W), disjoint per kw
        rhs5 = rhs5 + band[None, :, None, :, None] * w[:, kw][:, None, :, None, :]
    rhs = rhs5.reshape(K, N)
    rhs = jnp.pad(rhs, ((0, Kp - K), (0, 0))).astype(jnp.bfloat16)   # (256, 128)

    b_row = jnp.tile(b, W).reshape(1, N).astype(jnp.float32)      # (1, 128)

    # ---- Pallas: one lane-dense MXU matmul for the whole forward ----------
    out = pl.pallas_call(
        conv_gemm_kernel,
        out_shape=jax.ShapeDtypeStruct((M, N), jnp.float32),
        grid=(1,),
        in_specs=[
            pl.BlockSpec((M, Kp), lambda i: (0, 0)),   # band rows (all batches)
            pl.BlockSpec((Kp, N), lambda i: (0, 0)),   # Toeplitz weights
            pl.BlockSpec((1, N), lambda i: (0, 0)),    # bias row
        ],
        out_specs=pl.BlockSpec((M, N), lambda i: (0, 0)),
        compiler_params=pltpu.CompilerParams(
            dimension_semantics=("arbitrary",)),
    )(lhs, rhs, b_row)

    # ---- unpack lane-dense slab back to NCHW (wrapper glue) ---------------
    y_nhwc = out.reshape(B, H, W, Cout)
    return jnp.transpose(y_nhwc, (0, 3, 1, 2))


@jax.jit
def quant_stub_wrapper_forward(x_nchw, w, b):
    """Mirrors QuantStubWrapper.forward: quant -> model -> dequant."""
    x = _quant_stub(x_nchw)                 # identity
    y = conv3x3_same_nchw(x, w, b)          # wrapped model (Conv2d 3x3, pad=1)
    y = _dequant_stub(y)                    # identity
    return y


if __name__ == "__main__":
    B, Cin, H, W = 2, 4, 16, 16
    Cout, KH, KW = 8, 3, 3

    key = jax.random.PRNGKey(0)
    kx, kw_, kb = jax.random.split(key, 3)

    x = jax.random.normal(kx, (B, Cin, H, W), dtype=jnp.float32)
    # Conv2d params stored in kernel-friendly (KH, KW, Cin, Cout) layout.
    w = 0.1 * jax.random.normal(kw_, (KH, KW, Cin, Cout), dtype=jnp.float32)
    b = 0.05 * jax.random.normal(kb, (Cout,), dtype=jnp.float32)

    y = quant_stub_wrapper_forward(x, w, b)
    jax.block_until_ready(y)

    # Reference: same conv with bf16-rounded operands (matches the kernel's
    # bf16 MXU operands, f32 accumulation).
    x_bf = x.astype(jnp.bfloat16).astype(jnp.float32)
    w_bf = w.astype(jnp.bfloat16).astype(jnp.float32)
    w_oihw = jnp.transpose(w_bf, (3, 2, 0, 1))  # (Cout, Cin, KH, KW)
    y_ref = jax.lax.conv_general_dilated(
        x_bf, w_oihw, window_strides=(1, 1), padding="SAME",
        dimension_numbers=("NCHW", "OIHW", "NCHW"),
    ) + b.reshape(1, Cout, 1, 1)

    assert y.shape == (B, Cout, H, W)
    assert jnp.allclose(y, y_ref, atol=1e-2, rtol=1e-2), \
        float(jnp.max(jnp.abs(y - y_ref)))

    print("KERNEL_OK")
</pallas_src>

<mosaic_0001>
module attributes {stable_mosaic.version = 11 : i64} {
  func.func @conv_gemm_kernel(%arg0: i32, %arg1: memref<32x256xbf16, #tpu.memory_space<vmem>>, %arg2: memref<256x128xbf16, #tpu.memory_space<vmem>>, %arg3: memref<1x128xf32, #tpu.memory_space<vmem>>, %arg4: memref<32x128xf32, #tpu.memory_space<vmem>>) attributes {dimension_semantics = [#tpu.dimension_semantics<arbitrary>], iteration_bounds = array<i64: 1>, scalar_prefetch = 0 : i64, scratch_operands = 0 : i64, tpu.core_type = #tpu.core_type<tc>, window_params = [{pipeline_mode = #tpu.pipeline_mode<synchronous>, transform_indices = @transform_0, window_bounds = array<i64: 32, 256>}, {pipeline_mode = #tpu.pipeline_mode<synchronous>, transform_indices = @transform_1, window_bounds = array<i64: 256, 128>}, {pipeline_mode = #tpu.pipeline_mode<synchronous>, transform_indices = @transform_2, window_bounds = array<i64: 1, 128>}, {pipeline_mode = #tpu.pipeline_mode<synchronous>, transform_indices = @transform_3, window_bounds = array<i64: 32, 128>}]} {
    %c0 = arith.constant 0 : index
    %c0_0 = arith.constant 0 : index
    %0 = vector.load %arg1[%c0, %c0_0] : memref<32x256xbf16, #tpu.memory_space<vmem>>, vector<32x256xbf16>
    %c0_1 = arith.constant 0 : index
    %c0_2 = arith.constant 0 : index
    %1 = vector.load %arg2[%c0_1, %c0_2] : memref<256x128xbf16, #tpu.memory_space<vmem>>, vector<256x128xbf16>
    %cst = arith.constant dense<0.000000e+00> : vector<32x128xf32>
    %2 = tpu.matmul %0, %1, %cst {dimension_numbers = #tpu.dot_dimension_numbers<[1], [0], [0], [1], [0, 0, 1, 1], [], []>} : vector<32x256xbf16>, vector<256x128xbf16>, vector<32x128xf32> -> vector<32x128xf32>
    %c0_3 = arith.constant 0 : index
    %c0_4 = arith.constant 0 : index
    %3 = vector.load %arg3[%c0_3, %c0_4] : memref<1x128xf32, #tpu.memory_space<vmem>>, vector<1x128xf32>
    %4 = vector.broadcast %3 : vector<1x128xf32> to vector<32x128xf32>
    %5 = arith.addf %2, %4 : vector<32x128xf32>
    %c0_5 = arith.constant 0 : index
    %c0_6 = arith.constant 0 : index
    %6 = vector.load %arg4[%c0_5, %c0_6] : memref<32x128xf32, #tpu.memory_space<vmem>>, vector<32x128xf32>
    tpu.vector_store %arg4[%c0_5, %c0_6], %5 {strides = array<i32>} : memref<32x128xf32, #tpu.memory_space<vmem>>, vector<32x128xf32>,
    return
  }
  func.func @transform_0(%arg0: i32) -> (i32, i32) {
    %c0_i32 = arith.constant 0 : i32
    %c0_i32_0 = arith.constant 0 : i32
    %c0_i32_1 = arith.constant 0 : i32
    return %c0_i32, %c0_i32_0 : i32, i32
  }
  func.func @transform_1(%arg0: i32) -> (i32, i32) {
    %c0_i32 = arith.constant 0 : i32
    %c0_i32_0 = arith.constant 0 : i32
    %c0_i32_1 = arith.constant 0 : i32
    return %c0_i32, %c0_i32_0 : i32, i32
  }
  func.func @transform_2(%arg0: i32) -> (i32, i32) {
    %c0_i32 = arith.constant 0 : i32
    %c0_i32_0 = arith.constant 0 : i32
    %c0_i32_1 = arith.constant 0 : i32
    return %c0_i32, %c0_i32_0 : i32, i32
  }
  func.func @transform_3(%arg0: i32) -> (i32, i32) {
    %c0_i32 = arith.constant 0 : i32
    %c0_i32_0 = arith.constant 0 : i32
    %c0_i32_1 = arith.constant 0 : i32
    return %c0_i32, %c0_i32_0 : i32, i32
  }
}

</mosaic_0001>

<llo_original>
// kernel: tile.8
$region0: #{tile.8}
  #allocation0 [shape = 's32[1]{0}', space=sflag, size = 0x4, scoped, tag = 'scoped memory for tile.8']
  %s0 = inlined_call_operand.vmem [shape: f32[8], index: 0, kind: input, shape index: {}]
  %s1 = inlined_call_operand.vmem [shape: f32[16,8], index: 1, kind: output, shape index: {}]
  // Predicated region
  $region2: #{tile.8} parent=0 // pred_check
    _
  $region3: #{tile.8} parent=0 // pred_check_branch
    %3 = sbr.rel (0) target = $region5
  $region4: #{tile.8} parent=0 // pred_region
    _
  $region5: #{tile.8} parent=0 // pred_fallthru
    _
  %v4 = vld [vmem:[%s0] ss:$0 sm:$0xff]
  %5 = vst [vmem:[%s1] sm:$0xff] %v4
  %s6 = scalar_lea.vmem %s1, 8
  %7 = vst [vmem:[%s6] sm:$0xff] %v4

// kernel: tile.9
$region0: #{tile.9}
  %s0 = inlined_call_operand.vmem [shape: f32[16,8], index: 0, kind: input, shape index: {}]
  %s1 = inlined_call_operand.vmem [shape: f32[1,128], index: 1, kind: output, shape index: {}]
  $region1: #{tile.9} parent=0
    #allocation0 [shape = 'u8[4096]{0}', space=vmem, size = 0x1000, scoped, tag = 'scoped mem for output reshape']
    %v2 = vld [vmem:[%s0] sm:$0x1]
    %vm3 = vcmask 64512
    %4 = vst.msk [vmem:[#allocation0] sm:$0x1] %vm3, %v2
    %s5 = scalar_lea.vmem %s0, 15
    %v6 = vld [vmem:[%s5] sm:$0x1]
    %7 = vrot.lane.b32.xlu0 %v6, 120
    %v8 = vpop.permute.xlu0 %7
    %vm9 = vcmask 1048512
    %10 = vst.msk [vmem:[#allocation0] sm:$0x1] %vm9, %v8
    %s11 = scalar_lea.vmem %s0, 14
    %v12 = vld [vmem:[%s11] sm:$0x1]
    %13 = vrot.lane.b32.xlu0 %v12, 112
    %v14 = vpop.permute.xlu0 %13
    %vm15 = vcmask 982912
    %16 = vst.msk [vmem:[#allocation0] sm:$0x1] %vm15, %v14
    %s17 = scalar_lea.vmem %s0, 13
    %v18 = vld [vmem:[%s17] sm:$0x1]
    %19 = vrot.lane.b32.xlu0 %v18, 104
    %v20 = vpop.permute.xlu0 %19
    %vm21 = vcmask 917312
    %22 = vst.msk [vmem:[#allocation0] sm:$0x1] %vm21, %v20
    %s23 = scalar_lea.vmem %s0, 12
    %v24 = vld [vmem:[%s23] sm:$0x1]
    %25 = vrot.lane.b32.xlu0 %v24, 96
    %v26 = vpop.permute.xlu0 %25
    %vm27 = vcmask 851712
    %28 = vst.msk [vmem:[#allocation0] sm:$0x1] %vm27, %v26
    %s29 = scalar_lea.vmem %s0, 11
    %v30 = vld [vmem:[%s29] sm:$0x1]
    %31 = vrot.lane.b32.xlu0 %v30, 88
    %v32 = vpop.permute.xlu0 %31
    %vm33 = vcmask 786112
    %34 = vst.msk [vmem:[#allocation0] sm:$0x1] %vm33, %v32
    %s35 = scalar_lea.vmem %s0, 10
    %v36 = vld [vmem:[%s35] sm:$0x1]
    %37 = vrot.lane.b32.xlu0 %v36, 80
    %v38 = vpop.permute.xlu0 %37
    %vm39 = vcmask 720512
    %40 = vst.msk [vmem:[#allocation0] sm:$0x1] %vm39, %v38
    %s41 = scalar_lea.vmem %s0, 9
    %v42 = vld [vmem:[%s41] sm:$0x1]
    %43 = vrot.lane.b32.xlu0 %v42, 72
    %v44 = vpop.permute.xlu0 %43
    %vm45 = vcmask 654912
    %46 = vst.msk [vmem:[#allocation0] sm:$0x1] %vm45, %v44
    %s47 = scalar_lea.vmem %s0, 8
    %v48 = vld [vmem:[%s47] sm:$0x1]
    %49 = vrot.lane.b32.xlu0 %v48, 64
    %v50 = vpop.permute.xlu0 %49
    %vm51 = vcmask 589312
    %52 = vst.msk [vmem:[#allocation0] sm:$0x1] %vm51, %v50
    %s53 = scalar_lea.vmem %s0, 7
    %v54 = vld [vmem:[%s53] sm:$0x1]
    %55 = vrot.lane.b32.xlu0 %v54, 56
    %v56 = vpop.permute.xlu0 %55
    %vm57 = vcmask 523712
    %58 = vst.msk [vmem:[#allocation0] sm:$0x1] %vm57, %v56
    %s59 = scalar_lea.vmem %s0, 6
    %v60 = vld [vmem:[%s59] sm:$0x1]
    %61 = vrot.lane.b32.xlu0 %v60, 48
    %v62 = vpop.permute.xlu0 %61
    %vm63 = vcmask 458112
    %64 = vst.msk [vmem:[#allocation0] sm:$0x1] %vm63, %v62
    %s65 = scalar_lea.vmem %s0, 5
    %v66 = vld [vmem:[%s65] sm:$0x1]
    %67 = vrot.lane.b32.xlu0 %v66, 40
    %v68 = vpop.permute.xlu0 %67
    %vm69 = vcmask 392512
    %70 = vst.msk [vmem:[#allocation0] sm:$0x1] %vm69, %v68
    %s71 = scalar_lea.vmem %s0, 4
    %v72 = vld [vmem:[%s71] sm:$0x1]
    %73 = vrot.lane.b32.xlu0 %v72, 32
    %v74 = vpop.permute.xlu0 %73
    %vm75 = vcmask 326912
    %76 = vst.msk [vmem:[#allocation0] sm:$0x1] %vm75, %v74
    %s77 = scalar_lea.vmem %s0, 3
    %v78 = vld [vmem:[%s77] sm:$0x1]
    %79 = vrot.lane.b32.xlu0 %v78, 24
    %v80 = vpop.permute.xlu0 %79
    %vm81 = vcmask 261312
    %82 = vst.msk [vmem:[#allocation0] sm:$0x1] %vm81, %v80
    %s83 = scalar_lea.vmem %s0, 2
    %v84 = vld [vmem:[%s83] sm:$0x1]
    %85 = vrot.lane.b32.xlu0 %v84, 16
    %v86 = vpop.permute.xlu0 %85
    %vm87 = vcmask 195712
    %88 = vst.msk [vmem:[#allocation0] sm:$0x1] %vm87, %v86
    %s89 = scalar_lea.vmem %s0, 1
    %v90 = vld [vmem:[%s89] sm:$0x1]
    %91 = vrot.lane.b32.xlu0 %v90, 8
    %v92 = vpop.permute.xlu0 %91
    %vm93 = vcmask 130112
    %94 = vst.msk [vmem:[#allocation0] sm:$0x1] %vm93, %v92
    %s96 = sshllo.u32 0, 1
    %v98 = vld [vmem:[#allocation0] sm:%s96]
    %s99 = sshllo.u32 0, 1
    %100 = vst [vmem:[%s1] sm:%s99] %v98

// kernel: quant_stub_wrapper_forward.1
$region0: #{quant_stub_wrapper_forward.1}
  #allocation0 [shape = 'u32[]', space=smem, size = 0x4, offset = 0x4, fixed_abs, tag = 'smem constant byte address 0x4 - core index']
  #allocation1 [shape = 'u32[144,128]{1,0:T(1,128)}', space=vmem, size = 0x12000, scoped, tag = 'internal scratch']
  %s0 = inlined_call_operand.vmem [shape: bf16[32,256], index: 0, kind: input, shape index: {}]
  %s1 = inlined_call_operand.vmem [shape: bf16[256,128], index: 1, kind: input, shape index: {}]
  %s2 = inlined_call_operand.vmem [shape: f32[1,128], index: 2, kind: input, shape index: {}]
  %s3 = inlined_call_operand.vmem [shape: f32[32,128], index: 3, kind: output, shape index: {}]
  %s4 = sld [smem:[#allocation0]]
  $region22: #{quant_stub_wrapper_forward.1} parent=0
    _
  %s6 = ssub.s32 1, %s4
  %s7 = scalar_select 0, %s6, %s4
  // Predicated region
  $region2: #{quant_stub_wrapper_forward.1} parent=0 // pred_check
    _
  $region3: #{quant_stub_wrapper_forward.1} parent=0 // pred_check_branch
    %9 = sbr.rel (0) target = $region5
  $region4: #{quant_stub_wrapper_forward.1} parent=0 // pred_region
    _
  $region5: #{quant_stub_wrapper_forward.1} parent=0 // pred_fallthru
    _
  // Predicated region
  $region6: #{quant_stub_wrapper_forward.1} parent=0 // pred_check
    _
  $region7: #{quant_stub_wrapper_forward.1} parent=0 // pred_check_branch
    %11 = sbr.rel (0) target = $region9
  $region8: #{quant_stub_wrapper_forward.1} parent=0 // pred_region
    _
  $region9: #{quant_stub_wrapper_forward.1} parent=0 // pred_fallthru
    _
  // Predicated region
  $region10: #{quant_stub_wrapper_forward.1} parent=0 // pred_check
    _
  $region11: #{quant_stub_wrapper_forward.1} parent=0 // pred_check_branch
    %13 = sbr.rel (0) target = $region13
  $region12: #{quant_stub_wrapper_forward.1} parent=0 // pred_region
    _
  $region13: #{quant_stub_wrapper_forward.1} parent=0 // pred_fallthru
    _
  %v15 = vld [vmem:[%s0] sm:$0xff]
  %v16 = vld [vmem:[%s0 + $0x8] sm:$0xff]
  %v17 = vld [vmem:[%s0 + $0x10] sm:$0xff]
  %v18 = vld [vmem:[%s0 + $0x18] sm:$0xff]
  %v19 = vld [vmem:[%s1] sm:$0xf]
  %v20 = vld [vmem:[%s1 + $0x4] sm:$0xf]
  %v21 = vld [vmem:[%s1 + $0x8] sm:$0xf]
  %v22 = vld [vmem:[%s1 + $0xc] sm:$0xf]
  %v23 = vld [vmem:[%s1 + $0x10] sm:$0xf]
  %v24 = vld [vmem:[%s1 + $0x14] sm:$0xf]
  %v25 = vld [vmem:[%s1 + $0x18] sm:$0xf]
  %v26 = vld [vmem:[%s1 + $0x1c] sm:$0xf]
  %v27 = vld [vmem:[%s1 + $0x20] sm:$0xf]
  %v28 = vld [vmem:[%s1 + $0x24] sm:$0xf]
  %v29 = vld [vmem:[%s1 + $0x28] sm:$0xf]
  %v30 = vld [vmem:[%s1 + $0x2c] sm:$0xf]
  %v31 = vld [vmem:[%s1 + $0x30] sm:$0xf]
  %v32 = vld [vmem:[%s1 + $0x34] sm:$0xf]
  %v33 = vld [vmem:[%s1 + $0x38] sm:$0xf]
  %v34 = vld [vmem:[%s1 + $0x3c] sm:$0xf]
  %v35 = vld [vmem:[%s1 + $0x40] sm:$0xf]
  %v36 = vld [vmem:[%s1 + $0x44] sm:$0xf]
  %v37 = vld [vmem:[%s1 + $0x48] sm:$0xf]
  %v38 = vld [vmem:[%s1 + $0x4c] sm:$0xf]
  %v39 = vld [vmem:[%s1 + $0x50] sm:$0xf]
  %v40 = vld [vmem:[%s1 + $0x54] sm:$0xf]
  %v41 = vld [vmem:[%s1 + $0x58] sm:$0xf]
  %v42 = vld [vmem:[%s1 + $0x5c] sm:$0xf]
  %v43 = vld [vmem:[%s1 + $0x60] sm:$0xf]
  %v44 = vld [vmem:[%s1 + $0x64] sm:$0xf]
  %v45 = vld [vmem:[%s1 + $0x68] sm:$0xf]
  %v46 = vld [vmem:[%s1 + $0x6c] sm:$0xf]
  %v47 = vld [vmem:[%s1 + $0x70] sm:$0xf]
  %v48 = vld [vmem:[%s1 + $0x74] sm:$0xf]
  %v49 = vld [vmem:[%s1 + $0x78] sm:$0xf]
  %v50 = vld [vmem:[%s1 + $0x7c] sm:$0xf]
  %v51 = vld [vmem:[%s2] sm:$0x1]
  %v53 = vlaneseq
  %v54 = vshrl.u32 %v53, 7
  %v55 = vsub.s32 0, %v54
  %v56 = vrot.slane %v51, %v55
  %v62 = vunpack.c.l.b16 %v15
  %v63 = vunpack.c.h.b16 %v15
  %v64 = vunpack.c.l.b16 %v16
  %v65 = vunpack.c.h.b16 %v16
  %v66 = vunpack.c.l.b16 %v17
  %v67 = vunpack.c.h.b16 %v17
  %v68 = vunpack.c.l.b16 %v18
  %v69 = vunpack.c.h.b16 %v18
  %v70 = vpack.c.b16 %v64, %v62
  %v71 = vpack.c.b16 %v65, %v63
  %v72 = vpack.c.b16 %v68, %v66
  %v73 = vpack.c.b16 %v69, %v67
  %v110 = vunpack.c.l.b16 %v19
  %v111 = vunpack.c.l.b16 %v20
  %v112 = vunpack.c.l.b16 %v21
  %v113 = vunpack.c.l.b16 %v22
  %v114 = vunpack.c.l.b16 %v23
  %v115 = vunpack.c.l.b16 %v24
  %v116 = vunpack.c.l.b16 %v25
  %v117 = vunpack.c.l.b16 %v26
  %v118 = vunpack.c.l.b16 %v27
  %v119 = vunpack.c.l.b16 %v28
  %v120 = vunpack.c.l.b16 %v29
  %v121 = vunpack.c.l.b16 %v30
  %v122 = vunpack.c.l.b16 %v31
  %v123 = vunpack.c.l.b16 %v32
  %v124 = vunpack.c.l.b16 %v33
  %v125 = vunpack.c.l.b16 %v34
  %v126 = vunpack.c.l.b16 %v35
  %v127 = vunpack.c.l.b16 %v36
  %v128 = vunpack.c.l.b16 %v37
  %v129 = vunpack.c.l.b16 %v38
  %v130 = vunpack.c.l.b16 %v39
  %v131 = vunpack.c.l.b16 %v40
  %v132 = vunpack.c.l.b16 %v41
  %v133 = vunpack.c.l.b16 %v42
  %v134 = vunpack.c.l.b16 %v43
  %v135 = vunpack.c.l.b16 %v44
  %v136 = vunpack.c.l.b16 %v45
  %v137 = vunpack.c.l.b16 %v46
  %v138 = vunpack.c.l.b16 %v47
  %v139 = vunpack.c.l.b16 %v48
  %v140 = vunpack.c.l.b16 %v49
  %v141 = vunpack.c.l.b16 %v50
  %v142 = vpack.c.b16 %v111, %v110
  %v143 = vpack.c.b16 %v113, %v112
  %v144 = vpack.c.b16 %v115, %v114
  %v145 = vpack.c.b16 %v117, %v116
  %v146 = vpack.c.b16 %v119, %v118
  %v147 = vpack.c.b16 %v121, %v120
  %v148 = vpack.c.b16 %v123, %v122
  %v149 = vpack.c.b16 %v125, %v124
  %v150 = vpack.c.b16 %v127, %v126
  %v151 = vpack.c.b16 %v129, %v128
  %v152 = vpack.c.b16 %v131, %v130
  %v153 = vpack.c.b16 %v133, %v132
  %v154 = vpack.c.b16 %v135, %v134
  %v155 = vpack.c.b16 %v137, %v136
  %v156 = vpack.c.b16 %v139, %v138
  %v157 = vpack.c.b16 %v141, %v140
  %174 = vmatprep.subr.bf16.mxu0 0
  %175 = vmatpush1.bf16.msra.mxu0 %v142
  %176 = vmatprep.subr.bf16.mxu0 0
  %177 = vmatpush1.bf16.msra.mxu0 %v143
  %178 = vmatprep.subr.bf16.mxu0 0
  %179 = vmatpush1.bf16.msra.mxu0 %v144
  %180 = vmatprep.subr.bf16.mxu0 0
  %181 = vmatpush1.bf16.msra.mxu0 %v145
  %182 = vmatprep.subr.bf16.mxu0 0
  %183 = vmatpush1.bf16.msra.mxu0 %v146
  %184 = vmatprep.subr.bf16.mxu0 0
  %185 = vmatpush1.bf16.msra.mxu0 %v147
  %186 = vmatprep.subr.bf16.mxu0 0
  %187 = vmatpush1.bf16.msra.mxu0 %v148
  %188 = vmatprep.subr.bf16.mxu0 0
  %189 = vmatpush1.bf16.msra.mxu0 %v149
  %190 = vmatprep.subr.bf16.mxu0 0
  %191 = vmatpush1.bf16.msra.mxu0 %v150
  %192 = vmatprep.subr.bf16.mxu0 0
  %193 = vmatpush1.bf16.msra.mxu0 %v151
  %194 = vmatprep.subr.bf16.mxu0 0
  %195 = vmatpush1.bf16.msra.mxu0 %v152
  %196 = vmatprep.subr.bf16.mxu0 0
  %197 = vmatpush1.bf16.msra.mxu0 %v153
  %198 = vmatprep.subr.bf16.mxu0 0
  %199 = vmatpush1.bf16.msra.mxu0 %v154
  %200 = vmatprep.subr.bf16.mxu0 0
  %201 = vmatpush1.bf16.msra.mxu0 %v155
  %202 = vmatprep.subr.bf16.mxu0 0
  %203 = vmatpush1.bf16.msra.mxu0 %v156
  %204 = vmatprep.subr.bf16.mxu0 0
  %205 = vmatpush1.bf16.msra.mxu0 %v157
  %206 = vmatprep.mubr.bf16.mxu0 %v71
  %207 = vmatmul.mubr.bf16.gmra.mrb[0].mxu0 %v70
  %v208 = vpop.f32.mrb[0].mxu0
  %v209 = vadd.f32 %v56, %v208
  %v210 = vpop.f32.mrb[0].mxu0
  %v211 = vpop.f32.mrb[0].mxu0
  %v212 = vadd.f32 %v56, %v211
  %v213 = vpop.f32.mrb[0].mxu0
  %214 = vmatprep.mubr.bf16.mxu0 %v73
  %215 = vmatmul.mubr.bf16.gmra.mrb[0].mxu0 %v72
  %v216 = vpop.f32.mrb[0].mxu0
  %v217 = vadd.f32 %v56, %v216
  %v218 = vpop.f32.mrb[0].mxu0
  %v219 = vpop.f32.mrb[0].mxu0
  %v220 = vadd.f32 %v56, %v219
  %v221 = vpop.f32.mrb[0].mxu0
  %222 = vdwg.mxu0
  %223 = vst [vmem:[%s3] sm:$0xff] %v209
  %224 = vst [vmem:[%s3 + $0x8] sm:$0xff] %v212
  %225 = vst [vmem:[%s3 + $0x10] sm:$0xff] %v217
  %226 = vst [vmem:[%s3 + $0x18] sm:$0xff] %v220
  // Predicated region
  $region14: #{quant_stub_wrapper_forward.1} parent=0 // pred_check
    _
  $region15: #{quant_stub_wrapper_forward.1} parent=0 // pred_check_branch
    %228 = sbr.rel (0) target = $region17
  $region16: #{quant_stub_wrapper_forward.1} parent=0 // pred_region
    _
  $region17: #{quant_stub_wrapper_forward.1} parent=0 // pred_fallthru
    _
  // Predicated region
  $region18: #{quant_stub_wrapper_forward.1} parent=0 // pred_check
    _
  $region19: #{quant_stub_wrapper_forward.1} parent=0 // pred_check_branch
    %230 = sbr.rel (0) target = $region21
  $region20: #{quant_stub_wrapper_forward.1} parent=0 // pred_region
    _
  $region21: #{quant_stub_wrapper_forward.1} parent=0 // pred_fallthru
    _

</llo_original>
